<compile_context>
chip_gen: v7x
topology: tpu7x:2x2x1
jax: 0.10.0
libtpu: 0.0.40
codegen_flags: <defaults>
</compile_context>

<pallas_src>
import jax
import jax.numpy as jnp
from jax.experimental import pallas as pl
from jax.experimental.pallas import tpu as pltpu


_VMEM_LIMIT_BYTES = 40 * 1024 * 1024          # safe scoped-VMEM budget on v5e/v6e/v7x
_DEFAULT_BLOCK_BYTES = 4 * 1024 * 1024        # ~4 MiB per block (in + out, double-buffered)


# ----------------------------------------------------------------------------
# Main fused kernel: pool + excite + scale on (nb, C, L) batch blocks.
# ----------------------------------------------------------------------------
def se_block_kernel(x_ref, w1t_ref, b1_ref, w2t_ref, b2_ref, o_ref):
    # x_ref:   (nb, C, L)
    # w1t_ref: (C, Ch)   -- already scaled by 1/L (average pool folded in)
    # b1_ref:  (1, Ch)
    # w2t_ref: (Ch, C)
    # b2_ref:  (1, C)

    # Squeeze: AdaptiveAvgPool1d(1) == mean over L; 1/L lives in w1t, so only a
    # sum is needed.  Accumulate in f32 without materializing an f32 copy of x.
    pooled = jnp.sum(x_ref[...], axis=2, dtype=jnp.float32)             # (nb, C)

    # Excite: two 1x1 convs as small matmuls on the MXU.
    h = jnp.dot(pooled, w1t_ref[...], preferred_element_type=jnp.float32)
    h = jnp.maximum(h + b1_ref[...], 0.0)                               # (nb, Ch)
    s = jnp.dot(h, w2t_ref[...], preferred_element_type=jnp.float32)
    s = jax.nn.sigmoid(s + b2_ref[...])                                 # (nb, C)

    # Scale: stream x at its native precision; cast only the (nb, C) gate.
    o_ref[...] = x_ref[...] * s.astype(o_ref.dtype)[:, :, None]


def _pick_nb(N, C, L, itemsize, max_block_bytes):
    """Batch rows per grid step.

    Targets ~max_block_bytes per block, keeps >= 2 grid steps when N >= 2 so
    the 'parallel' batch axis can be split across v7x's two TensorCores, and
    rounds to a sublane-aligned multiple when large enough.
    """
    row_bytes = max(1, C * L * itemsize)
    nb = max(1, max_block_bytes // row_bytes)
    nb = min(nb, N)
    if N >= 2:
        nb = min(nb, (N + 1) // 2)            # guarantee at least 2 grid steps
    align = 8 if itemsize >= 4 else 16        # sublane alignment (16 for packed dtypes)
    if nb >= align:
        nb = (nb // align) * align
    return max(1, int(nb))


# ----------------------------------------------------------------------------
# Fallback for a single row (C*L) exceeding the per-block VMEM budget:
# gates from XLA (N*C values only), bandwidth-dominant scale pass in Pallas.
# ----------------------------------------------------------------------------
def _se_scale_kernel(x_ref, s_ref, o_ref):
    # x_ref: (tr, tl), s_ref: (tr, 1)
    o_ref[...] = x_ref[...] * s_ref[...].astype(o_ref.dtype)


def _pick_2d_tiles(n_rows, L, itemsize, max_block_bytes):
    # Lane dim: full L when 8 rows of it fit the budget (or L is tiny);
    # otherwise a 128-aligned chunk that leaves room for >= 8 sublanes.
    if L <= 128 or 8 * L * itemsize <= max_block_bytes:
        tl = L
    else:
        max_tl = max(128, (max_block_bytes // (8 * itemsize)) // 128 * 128)
        tl = min((L // 128) * 128, max_tl)
    tr = max(1, max_block_bytes // (tl * itemsize))
    if tr >= n_rows:
        tr = n_rows
    else:
        tr = max(8, (tr // 8) * 8)
        tr = min(tr, n_rows)
    return int(tr), int(tl)


def _se_block_large_row(x, w1, b1, w2, b2, *, max_block_bytes):
    N, C, L = x.shape
    itemsize = jnp.dtype(x.dtype).itemsize

    # Gates are only N*C values -- negligible next to x; let XLA produce them.
    pooled = jnp.mean(x, axis=2, dtype=jnp.float32)                      # (N, C)
    h = jnp.maximum(pooled @ w1.astype(jnp.float32).T + b1.astype(jnp.float32), 0.0)
    s = jax.nn.sigmoid(h @ w2.astype(jnp.float32).T + b2.astype(jnp.float32))  # (N, C)

    n_rows = N * C
    x2 = x.reshape(n_rows, L)            # contiguous collapse: no data movement
    s2 = s.reshape(n_rows, 1)
    tr, tl = _pick_2d_tiles(n_rows, L, itemsize, max_block_bytes)

    out = pl.pallas_call(
        _se_scale_kernel,
        out_shape=jax.ShapeDtypeStruct((n_rows, L), x.dtype),
        grid_spec=pltpu.PrefetchScalarGridSpec(
            num_scalar_prefetch=0,
            grid=(pl.cdiv(n_rows, tr), pl.cdiv(L, tl)),
            in_specs=[
                pl.BlockSpec((tr, tl), lambda r, l: (r, l)),
                pl.BlockSpec((tr, 1), lambda r, l: (r, 0)),
            ],
            out_specs=pl.BlockSpec((tr, tl), lambda r, l: (r, l)),
        ),
        compiler_params=pltpu.CompilerParams(
            dimension_semantics=("parallel", "parallel"),
            vmem_limit_bytes=_VMEM_LIMIT_BYTES),
        cost_estimate=pl.CostEstimate(
            flops=int(n_rows * L),
            transcendentals=0,
            bytes_accessed=int(2 * n_rows * L * itemsize)),
    )(x2, s2)
    return out.reshape(N, C, L)


# ----------------------------------------------------------------------------
# Wrapper
# ----------------------------------------------------------------------------
def se_block(x, w1, b1, w2, b2, *, nb=None,
             max_block_bytes=_DEFAULT_BLOCK_BYTES, donate_x=False):
    """x: (N, C, L).  w1: (Ch, C), b1: (Ch,), w2: (C, Ch), b2: (C,)."""
    N, C, L = x.shape
    Ch = w1.shape[0]
    itemsize = jnp.dtype(x.dtype).itemsize
    row_bytes = C * L * itemsize

    if row_bytes > max_block_bytes:
        # One (1, C, L) row does not fit the per-block budget: two-pass path.
        return _se_block_large_row(x, w1, b1, w2, b2,
                                   max_block_bytes=max_block_bytes)

    if nb is None:
        nb = _pick_nb(N, C, L, itemsize, max_block_bytes)
    nb = int(max(1, min(nb, N)))
    n_blocks = pl.cdiv(N, nb)   # ragged last block: OOB rows are never stored

    # Preprocess params: transpose weights, fold 1/L into the first conv,
    # biases lane-major.
    w1t = (w1.astype(jnp.float32).T) / jnp.float32(L)       # (C, Ch)
    w2t = w2.astype(jnp.float32).T                          # (Ch, C)
    b1_r = b1.astype(jnp.float32).reshape(1, Ch)            # (1, Ch)
    b2_r = b2.astype(jnp.float32).reshape(1, C)             # (1, C)

    cost = pl.CostEstimate(
        flops=int(2 * N * C * L + 4 * N * C * Ch),
        transcendentals=int(N * C),
        bytes_accessed=int(2 * N * C * L * itemsize + (2 * C * Ch + C + Ch) * 4),
    )

    return pl.pallas_call(
        se_block_kernel,
        out_shape=jax.ShapeDtypeStruct((N, C, L), x.dtype),
        grid_spec=pltpu.PrefetchScalarGridSpec(
            num_scalar_prefetch=0,
            grid=(n_blocks,),
            in_specs=[
                pl.BlockSpec((nb, C, L), lambda n: (n, 0, 0)),   # x block
                pl.BlockSpec((C, Ch), lambda n: (0, 0)),         # w1t (whole)
                pl.BlockSpec((1, Ch), lambda n: (0, 0)),         # b1
                pl.BlockSpec((Ch, C), lambda n: (0, 0)),         # w2t (whole)
                pl.BlockSpec((1, C), lambda n: (0, 0)),          # b2
            ],
            out_specs=pl.BlockSpec((nb, C, L), lambda n: (n, 0, 0)),
        ),
        compiler_params=pltpu.CompilerParams(
            dimension_semantics=("parallel",),
            vmem_limit_bytes=_VMEM_LIMIT_BYTES),
        cost_estimate=cost,
        input_output_aliases={0: 0} if donate_x else {},
    )(x, w1t, b1_r, w2t, b2_r)


def se_block_ref(x, w1, b1, w2, b2):
    pooled = jnp.mean(x, axis=2, keepdims=True)                    # (N, C, 1)
    h = jnp.einsum('oc,ncl->nol', w1, pooled) + b1[None, :, None]
    h = jnp.maximum(h, 0.0)
    s = jnp.einsum('oc,ncl->nol', w2, h) + b2[None, :, None]
    s = jax.nn.sigmoid(s)
    return x * s


if __name__ == "__main__":
    # Small shapes consistent with the module: n_channels=16, se_ratio=4, L=128.
    N, C, L = 2, 16, 128
    se_ratio = 4
    Ch = C // se_ratio

    key = jax.random.PRNGKey(0)
    kx, k1, k2, k3, k4 = jax.random.split(key, 5)
    x = jax.random.normal(kx, (N, C, L), dtype=jnp.float32)
    # Conv1d k=1 weights squeezed to 2D.
    w1 = jax.random.normal(k1, (Ch, C), dtype=jnp.float32) * 0.1
    b1 = jax.random.normal(k2, (Ch,), dtype=jnp.float32) * 0.1
    w2 = jax.random.normal(k3, (C, Ch), dtype=jnp.float32) * 0.1
    b2 = jax.random.normal(k4, (C,), dtype=jnp.float32) * 0.1

    ref = se_block_ref(x, w1, b1, w2, b2)

    # Primary check: fused single-pass kernel (2 grid steps so v7x can use both TCs).
    out = se_block(x, w1, b1, w2, b2)
    jax.block_until_ready(out)
    assert out.shape == (N, C, L)
    assert jnp.allclose(out, ref, atol=1e-5, rtol=1e-5), "mismatch vs reference"

    # Ragged-N check: non-divisible grid, boundary block handled by Pallas
    # store masking (no jnp.pad / out[:N] round trip).
    N2 = 5
    x2 = jax.random.normal(jax.random.PRNGKey(1), (N2, C, L), dtype=jnp.float32)
    out2 = se_block(x2, w1, b1, w2, b2, nb=2)
    jax.block_until_ready(out2)
    ref2 = se_block_ref(x2, w1, b1, w2, b2)
    assert out2.shape == (N2, C, L)
    assert jnp.allclose(out2, ref2, atol=1e-5, rtol=1e-5), "mismatch vs reference (ragged grid)"

    # Oversized-row fallback check: force the two-pass path with a tiny budget.
    out3 = se_block(x, w1, b1, w2, b2, max_block_bytes=1024)
    jax.block_until_ready(out3)
    assert jnp.allclose(out3, ref, atol=1e-5, rtol=1e-5), "mismatch vs reference (fallback path)"

    print("KERNEL_OK")
</pallas_src>

<mosaic_0001>
module attributes {stable_mosaic.version = 11 : i64} {
  func.func @se_block_kernel(%arg0: i32, %arg1: memref<1x16x128xf32, #tpu.memory_space<vmem>>, %arg2: memref<16x4xf32, #tpu.memory_space<vmem>>, %arg3: memref<1x4xf32, #tpu.memory_space<vmem>>, %arg4: memref<4x16xf32, #tpu.memory_space<vmem>>, %arg5: memref<1x16xf32, #tpu.memory_space<vmem>>, %arg6: memref<1x16x128xf32, #tpu.memory_space<vmem>>) attributes {dimension_semantics = [#tpu.dimension_semantics<parallel>], iteration_bounds = array<i64: 2>, scalar_prefetch = 0 : i64, scratch_operands = 0 : i64, tpu.core_type = #tpu.core_type<tc>, window_params = [{transform_indices = @transform_0, window_bounds = array<i64: 1, 16, 128>}, {pipeline_mode = #tpu.pipeline_mode<synchronous>, transform_indices = @transform_1, window_bounds = array<i64: 16, 4>}, {pipeline_mode = #tpu.pipeline_mode<synchronous>, transform_indices = @transform_2, window_bounds = array<i64: 1, 4>}, {pipeline_mode = #tpu.pipeline_mode<synchronous>, transform_indices = @transform_3, window_bounds = array<i64: 4, 16>}, {pipeline_mode = #tpu.pipeline_mode<synchronous>, transform_indices = @transform_4, window_bounds = array<i64: 1, 16>}, {transform_indices = @transform_5, window_bounds = array<i64: 1, 16, 128>}]} {
    %c0 = arith.constant 0 : index
    %c0_0 = arith.constant 0 : index
    %c0_1 = arith.constant 0 : index
    %0 = vector.load %arg1[%c0, %c0_0, %c0_1] : memref<1x16x128xf32, #tpu.memory_space<vmem>>, vector<1x16x128xf32>
    %cst = arith.constant dense<0.000000e+00> : vector<1x16xf32>
    %1 = vector.multi_reduction <add>, %0, %cst [2] : vector<1x16x128xf32> to vector<1x16xf32>
    %c0_2 = arith.constant 0 : index
    %c0_3 = arith.constant 0 : index
    %2 = vector.load %arg2[%c0_2, %c0_3] : memref<16x4xf32, #tpu.memory_space<vmem>>, vector<16x4xf32>
    %cst_4 = arith.constant dense<0.000000e+00> : vector<1x4xf32>
    %3 = tpu.matmul %1, %2, %cst_4 {dimension_numbers = #tpu.dot_dimension_numbers<[1], [0], [0], [1], [0, 0, 1, 1], [], []>} : vector<1x16xf32>, vector<16x4xf32>, vector<1x4xf32> -> vector<1x4xf32>
    %c0_5 = arith.constant 0 : index
    %c0_6 = arith.constant 0 : index
    %4 = vector.load %arg3[%c0_5, %c0_6] : memref<1x4xf32, #tpu.memory_space<vmem>>, vector<1x4xf32>
    %5 = arith.addf %3, %4 : vector<1x4xf32>
    %cst_7 = arith.constant 0.000000e+00 : f32
    %6 = vector.broadcast %cst_7 : f32 to vector<1x4xf32>
    %7 = arith.maximumf %5, %6 : vector<1x4xf32>
    %c0_8 = arith.constant 0 : index
    %c0_9 = arith.constant 0 : index
    %8 = vector.load %arg4[%c0_8, %c0_9] : memref<4x16xf32, #tpu.memory_space<vmem>>, vector<4x16xf32>
    %cst_10 = arith.constant dense<0.000000e+00> : vector<1x16xf32>
    %9 = tpu.matmul %7, %8, %cst_10 {dimension_numbers = #tpu.dot_dimension_numbers<[1], [0], [0], [1], [0, 0, 1, 1], [], []>} : vector<1x4xf32>, vector<4x16xf32>, vector<1x16xf32> -> vector<1x16xf32>
    %c0_11 = arith.constant 0 : index
    %c0_12 = arith.constant 0 : index
    %10 = vector.load %arg5[%c0_11, %c0_12] : memref<1x16xf32, #tpu.memory_space<vmem>>, vector<1x16xf32>
    %11 = arith.addf %9, %10 : vector<1x16xf32>
    %12 = arith.negf %11 : vector<1x16xf32>
    %13 = math.exp %12 : vector<1x16xf32>
    %cst_13 = arith.constant 1.000000e+00 : f32
    %14 = vector.broadcast %cst_13 : f32 to vector<1x16xf32>
    %15 = arith.addf %14, %13 : vector<1x16xf32>
    %16 = arith.divf %14, %15 : vector<1x16xf32>
    %c0_14 = arith.constant 0 : index
    %c0_15 = arith.constant 0 : index
    %c0_16 = arith.constant 0 : index
    %17 = vector.load %arg1[%c0_14, %c0_15, %c0_16] : memref<1x16x128xf32, #tpu.memory_space<vmem>>, vector<1x16x128xf32>
    %18 = vector.shape_cast %16 : vector<1x16xf32> to vector<1x16x1xf32>
    %19 = vector.broadcast %18 : vector<1x16x1xf32> to vector<1x16x128xf32>
    %20 = arith.mulf %17, %19 : vector<1x16x128xf32>
    %c0_17 = arith.constant 0 : index
    %c0_18 = arith.constant 0 : index
    %c0_19 = arith.constant 0 : index
    %21 = vector.load %arg6[%c0_17, %c0_18, %c0_19] : memref<1x16x128xf32, #tpu.memory_space<vmem>>, vector<1x16x128xf32>
    tpu.vector_store %arg6[%c0_17, %c0_18, %c0_19], %20 {strides = array<i32>} : memref<1x16x128xf32, #tpu.memory_space<vmem>>, vector<1x16x128xf32>,
    return
  }
  func.func @transform_0(%arg0: i32) -> (i32, i32, i32) {
    %c0_i32 = arith.constant 0 : i32
    %c0_i32_0 = arith.constant 0 : i32
    %c0_i32_1 = arith.constant 0 : i32
    return %arg0, %c0_i32, %c0_i32_0 : i32, i32, i32
  }
  func.func @transform_1(%arg0: i32) -> (i32, i32) {
    %c0_i32 = arith.constant 0 : i32
    %c0_i32_0 = arith.constant 0 : i32
    %c0_i32_1 = arith.constant 0 : i32
    return %c0_i32, %c0_i32_0 : i32, i32
  }
  func.func @transform_2(%arg0: i32) -> (i32, i32) {
    %c0_i32 = arith.constant 0 : i32
    %c0_i32_0 = arith.constant 0 : i32
    %c0_i32_1 = arith.constant 0 : i32
    return %c0_i32, %c0_i32_0 : i32, i32
  }
  func.func @transform_3(%arg0: i32) -> (i32, i32) {
    %c0_i32 = arith.constant 0 : i32
    %c0_i32_0 = arith.constant 0 : i32
    %c0_i32_1 = arith.constant 0 : i32
    return %c0_i32, %c0_i32_0 : i32, i32
  }
  func.func @transform_4(%arg0: i32) -> (i32, i32) {
    %c0_i32 = arith.constant 0 : i32
    %c0_i32_0 = arith.constant 0 : i32
    %c0_i32_1 = arith.constant 0 : i32
    return %c0_i32, %c0_i32_0 : i32, i32
  }
  func.func @transform_5(%arg0: i32) -> (i32, i32, i32) {
    %c0_i32 = arith.constant 0 : i32
    %c0_i32_0 = arith.constant 0 : i32
    %c0_i32_1 = arith.constant 0 : i32
    return %arg0, %c0_i32, %c0_i32_0 : i32, i32, i32
  }
}

</mosaic_0001>

<llo_original>
// kernel: tpu_custom_call.1
$region0: #{tpu_custom_call.1}
  #allocation0 [shape = 'u32[]', space=smem, size = 0x4, offset = 0x4, fixed_abs, tag = 'smem constant byte address 0x4 - core index']
  #allocation1 [shape = 'u32[144,128]{1,0:T(1,128)}', space=vmem, size = 0x12000, scoped, tag = 'internal scratch']
  %s0 = inlined_call_operand.hbm [shape: f32[2,16,128], index: 0, kind: input, shape index: {}]
  %s1 = inlined_call_operand.vmem [shape: f32[16,4], index: 1, kind: input, shape index: {}]
  %s2 = inlined_call_operand.vmem [shape: f32[1,4], index: 2, kind: input, shape index: {}]
  %s3 = inlined_call_operand.vmem [shape: f32[4,16], index: 3, kind: input, shape index: {}]
  %s4 = inlined_call_operand.vmem [shape: f32[1,16], index: 4, kind: input, shape index: {}]
  %s5 = inlined_call_operand.hbm [shape: f32[2,16,128], index: 5, kind: output, shape index: {}]
  %s6 = sld [smem:[#allocation0]]
  $region57: #{tpu_custom_call.1} parent=0
    _
  %s8 = ssub.s32 1, %s6
  %s9 = scalar_select 0, %s8, %s6
  $region1: #{tpu_custom_call.1} parent=0
    #allocation2 [shape = 'u8[16384]{0}', space=vmem, size = 0x4000, scoped, tag = 'input window, operand 0']
    #allocation3 [shape = 's32[2]{0}', space=sflag, size = 0x8, scoped, tag = 'scoped memory for tpu_custom_call.1']
    #allocation4 [shape = 's32[2]{0}', space=sflag, size = 0x8, scoped, tag = 'scoped memory for tpu_custom_call.1']
    #allocation5 [shape = 'u8[16384]{0}', space=vmem, size = 0x4000, scoped, tag = 'output window, operand 0']
    %10 = vsyncpa [#allocation3], 0
    %s11 = scalar_lea.sflag [#allocation3], 1
    %12 = vsyncpa %s11, 0
    %13 = vsyncpa [#allocation4], 0
    %s14 = scalar_lea.sflag [#allocation4], 1
    %15 = vsyncpa %s14, 0
    loop: start=0, step=1, limit=4
    $region2: #{tpu_custom_call.1} parent=1 // loop_pre_header
      _
    $region3: #{tpu_custom_call.1} parent=1 // loop_header
      %s17 = sphi 0, %s21
      %p18 = scmp.ge.s32.totalorder %s17, 4
      %s27 = sphi 0, %s29
      %s30 = sphi 0, %s27
      %s31 = sphi 0, %s30
      %s47 = sphi 0, %s31
      %s51 = sphi 0, %s51
      %s53 = sphi 0, %s51
      %s54 = sphi 0, %s53
      %s68 = sphi 0, %s54
      %s72 = sphi 0, %s72
      %s74 = sphi 0, %s72
      %s75 = sphi 0, %s74
      %s89 = sphi 0, %s75
      %s93 = sphi 0, %s93
      %s95 = sphi 0, %s93
      %s96 = sphi 0, %s95
      %s110 = sphi 0, %s96
      %s114 = sphi 0, %s114
      %s116 = sphi 0, %s114
      %s117 = sphi 0, %s116
      %s131 = sphi 0, %s117
      %s137 = sphi 0, %s139
      %s140 = sphi 0, %s137
      %s141 = sphi 0, %s140
      %s157 = sphi 0, %s141
    $region4: #{tpu_custom_call.1} parent=1 // loop_header_branch
      %20 = sbr.rel (%p18) target = $region8
    $region5: #{tpu_custom_call.1} parent=1 // loop_body
      %s22 = ssub.s32 %s17, 1
      %s23 = ssub.s32 %s17, 2
      %s24 = sadd.s32 %s17, 1
      %s25 = ssub.s32 %s17, %s24
      %p26 = scmp.eq.s32.totalorder %s25, 0
      %s28 = sadd.s32 %s27, 1
      %s29 = scalar_select %p26, %s27, %s28
      %p32 = pneg %p26
      %p33 = scmp.eq.s32.totalorder %s17, 1
      %p34 = por %p32, %p33
      %p35 = scmp.ne.s32.totalorder %s27, %s30
      %p36 = scmp.eq.s32.totalorder %s17, 0
      %p37 = por %p35, %p36
      %p38 = scmp.ne.s32.totalorder %s27, %s30
      %p39 = scmp.eq.s32.totalorder %s22, 1
      %p40 = por %p38, %p39
      %p41 = scmp.ne.s32.totalorder %s30, %s31
      %p42 = scmp.eq.s32.totalorder %s22, 0
      %p43 = por %p41, %p42
      %p44 = scmp.ne.s32.totalorder %s30, %s31
      %p45 = scmp.eq.s32.totalorder %s23, 1
      %p46 = por %p44, %p45
      %p48 = scmp.ne.s32.totalorder %s31, %s47
      %p49 = scmp.eq.s32.totalorder %s23, 0
      %p50 = por %p48, %p49
      %s52 = sadd.s32 %s51, 1
      %p55 = scmp.eq.s32.totalorder %s17, 1
      %p56 = scmp.ne.s32.totalorder %s51, %s53
      %p57 = scmp.eq.s32.totalorder %s17, 0
      %p58 = por %p56, %p57
      %p59 = scmp.ne.s32.totalorder %s51, %s53
      %p60 = scmp.eq.s32.totalorder %s22, 1
      %p61 = por %p59, %p60
      %p62 = scmp.ne.s32.totalorder %s53, %s54
      %p63 = scmp.eq.s32.totalorder %s22, 0
      %p64 = por %p62, %p63
      %p65 = scmp.ne.s32.totalorder %s53, %s54
      %p66 = scmp.eq.s32.totalorder %s23, 1
      %p67 = por %p65, %p66
      %p69 = scmp.ne.s32.totalorder %s54, %s68
      %p70 = scmp.eq.s32.totalorder %s23, 0
      %p71 = por %p69, %p70
      %s73 = sadd.s32 %s72, 1
      %p76 = scmp.eq.s32.totalorder %s17, 1
      %p77 = scmp.ne.s32.totalorder %s72, %s74
      %p78 = scmp.eq.s32.totalorder %s17, 0
      %p79 = por %p77, %p78
      %p80 = scmp.ne.s32.totalorder %s72, %s74
      %p81 = scmp.eq.s32.totalorder %s22, 1
      %p82 = por %p80, %p81
      %p83 = scmp.ne.s32.totalorder %s74, %s75
      %p84 = scmp.eq.s32.totalorder %s22, 0
      %p85 = por %p83, %p84
      %p86 = scmp.ne.s32.totalorder %s74, %s75
      %p87 = scmp.eq.s32.totalorder %s23, 1
      %p88 = por %p86, %p87
      %p90 = scmp.ne.s32.totalorder %s75, %s89
      %p91 = scmp.eq.s32.totalorder %s23, 0
      %p92 = por %p90, %p91
      %s94 = sadd.s32 %s93, 1
      %p97 = scmp.eq.s32.totalorder %s17, 1
      %p98 = scmp.ne.s32.totalorder %s93, %s95
      %p99 = scmp.eq.s32.totalorder %s17, 0
      %p100 = por %p98, %p99
      %p101 = scmp.ne.s32.totalorder %s93, %s95
      %p102 = scmp.eq.s32.totalorder %s22, 1
      %p103 = por %p101, %p102
      %p104 = scmp.ne.s32.totalorder %s95, %s96
      %p105 = scmp.eq.s32.totalorder %s22, 0
      %p106 = por %p104, %p105
      %p107 = scmp.ne.s32.totalorder %s95, %s96
      %p108 = scmp.eq.s32.totalorder %s23, 1
      %p109 = por %p107, %p108
      %p111 = scmp.ne.s32.totalorder %s96, %s110
      %p112 = scmp.eq.s32.totalorder %s23, 0
      %p113 = por %p111, %p112
      %s115 = sadd.s32 %s114, 1
      %p118 = scmp.eq.s32.totalorder %s17, 1
      %p119 = scmp.ne.s32.totalorder %s114, %s116
      %p120 = scmp.eq.s32.totalorder %s17, 0
      %p121 = por %p119, %p120
      %p122 = scmp.ne.s32.totalorder %s114, %s116
      %p123 = scmp.eq.s32.totalorder %s22, 1
      %p124 = por %p122, %p123
      %p125 = scmp.ne.s32.totalorder %s116, %s117
      %p126 = scmp.eq.s32.totalorder %s22, 0
      %p127 = por %p125, %p126
      %p128 = scmp.ne.s32.totalorder %s116, %s117
      %p129 = scmp.eq.s32.totalorder %s23, 1
      %p130 = por %p128, %p129
      %p132 = scmp.ne.s32.totalorder %s117, %s131
      %p133 = scmp.eq.s32.totalorder %s23, 0
      %p134 = por %p132, %p133
      %s135 = ssub.s32 %s17, %s24
      %p136 = scmp.eq.s32.totalorder %s135, 0
      %s138 = sadd.s32 %s137, 1
      %s139 = scalar_select %p136, %s137, %s138
      %p142 = pneg %p136
      %p143 = scmp.eq.s32.totalorder %s17, 1
      %p144 = por %p142, %p143
      %p145 = scmp.ne.s32.totalorder %s137, %s140
      %p146 = scmp.eq.s32.totalorder %s17, 0
      %p147 = por %p145, %p146
      %p148 = scmp.ne.s32.totalorder %s137, %s140
      %p149 = scmp.eq.s32.totalorder %s22, 1
      %p150 = por %p148, %p149
      %p151 = scmp.ne.s32.totalorder %s140, %s141
      %p152 = scmp.eq.s32.totalorder %s22, 0
      %p153 = por %p151, %p152
      %p154 = scmp.ne.s32.totalorder %s140, %s141
      %p155 = scmp.eq.s32.totalorder %s23, 1
      %p156 = por %p154, %p155
      %p158 = scmp.ne.s32.totalorder %s141, %s157
      %p159 = scmp.eq.s32.totalorder %s23, 0
      %p160 = por %p158, %p159
      %p161 = scmp.le.s32.totalorder 1, %s17
      %p162 = scmp.lt.s32.totalorder %s17, 3
      %p163 = pnand %p161, %p162
      %p164 = pneg %p163
      // Predicated region
      $region9: #{tpu_custom_call.1} parent=5 // pred_check
        _
      $region10: #{tpu_custom_call.1} parent=5 // pred_check_branch
        %166 = sbr.rel (%p163) target = $region12
      $region11: #{tpu_custom_call.1} parent=5 // pred_region
        %s167 = ssub.s32 %s17, 1
        // Predicated region
        $region13: #{tpu_custom_call.1} parent=11 // pred_check
          %p168 = pneg %p64
        $region14: #{tpu_custom_call.1} parent=11 // pred_check_branch
          %170 = sbr.rel (%p168) target = $region16
        $region15: #{tpu_custom_call.1} parent=11 // pred_region
          _
        $region16: #{tpu_custom_call.1} parent=11 // pred_fallthru
          _
        // Predicated region
        $region17: #{tpu_custom_call.1} parent=11 // pred_check
          %p171 = pneg %p85
        $region18: #{tpu_custom_call.1} parent=11 // pred_check_branch
          %173 = sbr.rel (%p171) target = $region20
        $region19: #{tpu_custom_call.1} parent=11 // pred_region
          _
        $region20: #{tpu_custom_call.1} parent=11 // pred_fallthru
          _
        // Predicated region
        $region21: #{tpu_custom_call.1} parent=11 // pred_check
          %p174 = pneg %p106
        $region22: #{tpu_custom_call.1} parent=11 // pred_check_branch
          %176 = sbr.rel (%p174) target = $region24
        $region23: #{tpu_custom_call.1} parent=11 // pred_region
          _
        $region24: #{tpu_custom_call.1} parent=11 // pred_fallthru
          _
        // Predicated region
        $region25: #{tpu_custom_call.1} parent=11 // pred_check
          %p177 = pneg %p127
        $region26: #{tpu_custom_call.1} parent=11 // pred_check_branch
          %179 = sbr.rel (%p177) target = $region28
        $region27: #{tpu_custom_call.1} parent=11 // pred_region
          _
        $region28: #{tpu_custom_call.1} parent=11 // pred_fallthru
          _
      $region12: #{tpu_custom_call.1} parent=5 // pred_fallthru
        _
      %p180 = scmp.lt.s32.totalorder %s17, 2
      // Predicated region
      $region29: #{tpu_custom_call.1} parent=5 // pred_check
        %p181 = pneg %p180
      $region30: #{tpu_custom_call.1} parent=5 // pred_check_branch
        %183 = sbr.rel (%p181) target = $region32
      $region31: #{tpu_custom_call.1} parent=5 // pred_region
        // Predicated region
        $region33: #{tpu_custom_call.1} parent=31 // pred_check
          %p184 = pneg %p37
        $region34: #{tpu_custom_call.1} parent=31 // pred_check_branch
          %186 = sbr.rel (%p184) target = $region36
        $region35: #{tpu_custom_call.1} parent=31 // pred_region
          %s187 = sand.u32 %s27, 1
          %s188 = scalar_lea.sflag [#allocation3], %s187
          %s189 = sand.u32 %s27, 1
          %s190 = smul.addr %s189, 16
          %s191 = scalar_lea.vmem [#allocation2], %s190
          %s193 = ssub.s32 256, 256
          %194 = vsyncadd %s188, %s193
          %s195 = smul.addr %s17, 2
          %s196 = smul.addr %s195, 128
          %s197 = scalar_lea.hbm %s0, %s196
          %s198 = sshll.u32 %s191, 4
          %s199 = int_to_ptr.vmem [resolvable:$true] %s198
          %204 = dma.hbm_to_vmem [thread:$0]  %s197, 256, %s199, %s188, 128, 128, 8
        $region36: #{tpu_custom_call.1} parent=31 // pred_fallthru
          _
      $region32: #{tpu_custom_call.1} parent=5 // pred_fallthru
        _
      %p205 = scmp.le.s32.totalorder 1, %s17
      %p206 = scmp.lt.s32.totalorder %s17, 3
      %p207 = pnand %p205, %p206
      %p208 = pneg %p207
      // Predicated region
      $region37: #{tpu_custom_call.1} parent=5 // pred_check
        _
      $region38: #{tpu_custom_call.1} parent=5 // pred_check_branch
        %210 = sbr.rel (%p207) target = $region40
      $region39: #{tpu_custom_call.1} parent=5 // pred_region
        %s211 = ssub.s32 %s17, 1
        %s212 = sand.u32 %s30, 1
        %s213 = scalar_lea.sflag [#allocation3], %s212
        %s214 = sand.u32 %s30, 1
        %s215 = smul.addr %s214, 16
        %s216 = scalar_lea.vmem [#allocation2], %s215
        // Predicated region
        $region41: #{tpu_custom_call.1} parent=39 // pred_check
          %p217 = pneg %p43
        $region42: #{tpu_custom_call.1} parent=39 // pred_check_branch
          %219 = sbr.rel (%p217) target = $region44
        $region43: #{tpu_custom_call.1} parent=39 // pred_region
          %220 = dma.done %s213, 256
        $region44: #{tpu_custom_call.1} parent=39 // pred_fallthru
          _
        %s221 = sand.u32 %s30, 1
        %s222 = scalar_lea.sflag [#allocation3], %s221
        %s223 = sand.u32 %s30, 1
        %s224 = smul.addr %s223, 16
        %s225 = scalar_lea.vmem [#allocation2], %s224
        %p226 = pneg %p43
        %p227 = pneg %p40
        %p228 = pneg %p64
        %p229 = pneg %p61
        %p230 = pneg %p85
        %p231 = pneg %p82
        %p232 = pneg %p106
        %p233 = pneg %p103
        %p234 = pneg %p127
        %p235 = pneg %p124
        %p236 = pneg %p153
        %p237 = pneg %p150
        %s238 = sand.u32 %s140, 1
        %s239 = scalar_lea.sflag [#allocation4], %s238
        %s240 = sand.u32 %s140, 1
        %s241 = smul.addr %s240, 16
        %s242 = scalar_lea.vmem [#allocation5], %s241
        %v243 = vld [vmem:[%s216] sm:$0xff]
        %v244 = vld [vmem:[%s216 + $0x8] sm:$0xff]
        %245 = vadd.xlane.f32.xlu0 %v243
        %v246 = vpop.xlane.xlu0 %245
        %247 = vadd.xlane.f32.xlu0 %v244
        %v248 = vpop.xlane.xlu0 %247
        %v249 = vld [vmem:[%s1] sm:$0xff]
        %v250 = vld [vmem:[%s1 + $0x8] sm:$0xff]
        %v251 = vld [vmem:[%s2] sm:$0x1]
        %v254 = vlaneseq
        %v255 = vand.u32 %v254, 127
        %v256 = vlaneseq
        %v257 = vshrl.u32 %v256, 7
        %v258 = vsub.s32 %v255, %v257
        %v259 = vrot.slane %v246, %v258
        %v260 = vadd.s32 %v255, 4294967288
        %v261 = vlaneseq
        %v262 = vshrl.u32 %v261, 7
        %v263 = vsub.s32 %v260, %v262
        %v264 = vrot.slane %v248, %v263
        %vm265 = vcmask 130112
        %v266 = vsel %vm265, %v264, %v259
        %vm267 = vcmask 130048
        %v268 = vsel %vm267, %v266, 0
        %270 = vmatprep.subr.mxu0 0.0
        %271 = vmatpush1.msra.mxu0 %v249
        %272 = vmatprep.subr.mxu0 0.0
        %273 = vmatpush1.msra.mxu0 %v250
        %274 = vmatprep.subr.mxu0 0.0
        %275 = vmatpush1.msra.mxu0 0.0
        %276 = vmatprep.subr.mxu0 0.0
        %277 = vmatpush1.msra.mxu0 0.0
        %278 = vmatprep.subr.mxu0 0.0
        %279 = vmatpush1.msra.mxu0 0.0
        %280 = vmatprep.subr.mxu0 0.0
        %281 = vmatpush1.msra.mxu0 0.0
        %282 = vmatprep.subr.mxu0 0.0
        %283 = vmatpush1.msra.mxu0 0.0
        %284 = vmatprep.subr.mxu0 0.0
        %285 = vmatpush1.msra.mxu0 0.0
        %286 = vmatprep.subr.mxu0 0.0
        %287 = vmatpush1.msra.mxu0 0.0
        %288 = vmatprep.subr.mxu0 0.0
        %289 = vmatpush1.msra.mxu0 0.0
        %290 = vmatprep.subr.mxu0 0.0
        %291 = vmatpush1.msra.mxu0 0.0
        %292 = vmatprep.subr.mxu0 0.0
        %293 = vmatpush1.msra.mxu0 0.0
        %294 = vmatprep.subr.mxu0 0.0
        %295 = vmatpush1.msra.mxu0 0.0
        %296 = vmatprep.subr.mxu0 0.0
        %297 = vmatpush1.msra.mxu0 0.0
        %298 = vmatprep.subr.mxu0 0.0
        %299 = vmatpush1.msra.mxu0 0.0
        %300 = vmatprep.subr.mxu0 0.0
        %301 = vmatpush1.msra.mxu0 0.0
        %302 = vmatprep.subr.mxu0 0.0
        %303 = vmatpush1.msra.mxu0 0.0
        %304 = vmatprep.subr.mxu0 0.0
        %305 = vmatpush1.msra.mxu0 0.0
        %306 = vmatprep.subr.mxu0 0.0
        %307 = vmatpush1.msra.mxu0 0.0
        %308 = vmatprep.subr.mxu0 0.0
        %309 = vmatpush1.msra.mxu0 0.0
        %310 = vmatprep.subr.mxu0 0.0
        %311 = vmatpush1.msra.mxu0 0.0
        %312 = vmatprep.subr.mxu0 0.0
        %313 = vmatpush1.msra.mxu0 0.0
        %314 = vmatprep.subr.mxu0 0.0
        %315 = vmatpush1.msra.mxu0 0.0
        %316 = vmatprep.subr.mxu0 0.0
        %317 = vmatpush1.msra.mxu0 0.0
        %318 = vmatprep.subr.mxu0 0.0
        %319 = vmatpush1.msra.mxu0 0.0
        %320 = vmatprep.subr.mxu0 0.0
        %321 = vmatpush1.msra.mxu0 0.0
        %322 = vmatprep.subr.mxu0 0.0
        %323 = vmatpush1.msra.mxu0 0.0
        %324 = vmatprep.subr.mxu0 0.0
        %325 = vmatpush1.msra.mxu0 0.0
        %326 = vmatprep.subr.mxu0 0.0
        %327 = vmatpush1.msra.mxu0 0.0
        %328 = vmatprep.subr.mxu0 0.0
        %329 = vmatpush1.msra.mxu0 0.0
        %330 = vmatprep.subr.mxu0 0.0
        %331 = vmatpush1.msra.mxu0 0.0
        %332 = vmatprep.subr.mxu0 0.0
        %333 = vmatpush1.msra.mxu0 0.0
        %334 = vmatprep.mubr.f32.mxu0 0.0
        %335 = vmatmul.mubr.f32.gmra.mrb[0].mxu0 %v268
        %v336 = vpop.f32.mrb[0].mxu0
        %v337 = vadd.f32 %v251, %v336
        %v338 = vpop.f32.mrb[0].mxu0
        %339 = vdwg.mxu0
        %v340 = vmax.f32 %v337, 0.0
        %v341 = vld [vmem:[%s3] sm:$0xf]
        %v342 = vld [vmem:[%s4] sm:$0x1]
        %vm343 = vcmask 31744
        %v345 = vsel %vm343, %v340, 0
        %vm347 = vcmask 1043456
        %v349 = vsel %vm347, %v341, 0
        %351 = vmatprep.subr.mxu0 0.0
        %352 = vmatpush1.msra.mxu0 %v349
        %353 = vmatprep.subr.mxu0 0.0
        %354 = vmatpush1.msra.mxu0 0.0
        %355 = vmatprep.subr.mxu0 0.0
        %356 = vmatpush1.msra.mxu0 0.0
        %357 = vmatprep.subr.mxu0 0.0
        %358 = vmatpush1.msra.mxu0 0.0
        %359 = vmatprep.subr.mxu0 0.0
        %360 = vmatpush1.msra.mxu0 0.0
        %361 = vmatprep.subr.mxu0 0.0
        %362 = vmatpush1.msra.mxu0 0.0
        %363 = vmatprep.subr.mxu0 0.0
        %364 = vmatpush1.msra.mxu0 0.0
        %365 = vmatprep.subr.mxu0 0.0
        %366 = vmatpush1.msra.mxu0 0.0
        %367 = vmatprep.subr.mxu0 0.0
        %368 = vmatpush1.msra.mxu0 0.0
        %369 = vmatprep.subr.mxu0 0.0
        %370 = vmatpush1.msra.mxu0 0.0
        %371 = vmatprep.subr.mxu0 0.0
        %372 = vmatpush1.msra.mxu0 0.0
        %373 = vmatprep.subr.mxu0 0.0
        %374 = vmatpush1.msra.mxu0 0.0
        %375 = vmatprep.subr.mxu0 0.0
        %376 = vmatpush1.msra.mxu0 0.0
        %377 = vmatprep.subr.mxu0 0.0
        %378 = vmatpush1.msra.mxu0 0.0
        %379 = vmatprep.subr.mxu0 0.0
        %380 = vmatpush1.msra.mxu0 0.0
        %381 = vmatprep.subr.mxu0 0.0
        %382 = vmatpush1.msra.mxu0 0.0
        %383 = vmatprep.subr.mxu0 0.0
        %384 = vmatpush1.msra.mxu0 0.0
        %385 = vmatprep.subr.mxu0 0.0
        %386 = vmatpush1.msra.mxu0 0.0
        %387 = vmatprep.subr.mxu0 0.0
        %388 = vmatpush1.msra.mxu0 0.0
        %389 = vmatprep.subr.mxu0 0.0
        %390 = vmatpush1.msra.mxu0 0.0
        %391 = vmatprep.subr.mxu0 0.0
        %392 = vmatpush1.msra.mxu0 0.0
        %393 = vmatprep.subr.mxu0 0.0
        %394 = vmatpush1.msra.mxu0 0.0
        %395 = vmatprep.subr.mxu0 0.0
        %396 = vmatpush1.msra.mxu0 0.0
        %397 = vmatprep.subr.mxu0 0.0
        %398 = vmatpush1.msra.mxu0 0.0
        %399 = vmatprep.subr.mxu0 0.0
        %400 = vmatpush1.msra.mxu0 0.0
        %401 = vmatprep.subr.mxu0 0.0
        %402 = vmatpush1.msra.mxu0 0.0
        %403 = vmatprep.subr.mxu0 0.0
        %404 = vmatpush1.msra.mxu0 0.0
        %405 = vmatprep.subr.mxu0 0.0
        %406 = vmatpush1.msra.mxu0 0.0
        %407 = vmatprep.subr.mxu0 0.0
        %408 = vmatpush1.msra.mxu0 0.0
        %409 = vmatprep.subr.mxu0 0.0
        %410 = vmatpush1.msra.mxu0 0.0
        %411 = vmatprep.subr.mxu0 0.0
        %412 = vmatpush1.msra.mxu0 0.0
        %413 = vmatprep.subr.mxu0 0.0
        %414 = vmatpush1.msra.mxu0 0.0
        %415 = vmatprep.mubr.f32.mxu0 0.0
        %416 = vmatmul.mubr.f32.gmra.mrb[0].mxu0 %v345
        %v417 = vpop.f32.mrb[0].mxu0
        %v418 = vadd.f32 %v342, %v417
        %v419 = vpop.f32.mrb[0].mxu0
        %420 = vdwg.mxu0
        %v421 = vxor.u32 %v418, 2147483648
        %v422 = vmul.f32 %v421, 1.442695
        %v423 = vpow.pop %v422
        %v424 = vadd.f32 %v423, 1.0
        %v425 = vrcp.pop %v424
        %v426 = vmul.f32 1.0, %v425
        %v427 = vlaneseq
        %v428 = vshrl.u32 %v427, 7
        %v429 = vsub.s32 0, %v428
        %v430 = vrot.slane %v426, %v429
        %432 = vbcast.lane.b32.xlu0 %v430, 256
        %v433 = vpop.permute.xlu0 %432
        %s435 = sor.u32 256, 8
        %436 = vbcast.lane.b32.xlu0 %v430, %s435
        %v437 = vpop.permute.xlu0 %436
        %v438 = vmul.f32 %v243, %v433
        %v439 = vmul.f32 %v244, %v437
        %440 = vst [vmem:[%s242] sm:$0xff] %v438
        %441 = vst [vmem:[%s242 + $0x8] sm:$0xff] %v439
        %s442 = sand.u32 %s140, 1
        %s443 = scalar_lea.sflag [#allocation4], %s442
        %s444 = sand.u32 %s140, 1
        %s445 = smul.addr %s444, 16
        %s446 = scalar_lea.vmem [#allocation5], %s445
        // Predicated region
        $region45: #{tpu_custom_call.1} parent=39 // pred_check
          %p447 = pneg %p150
        $region46: #{tpu_custom_call.1} parent=39 // pred_check_branch
          %449 = sbr.rel (%p447) target = $region48
        $region47: #{tpu_custom_call.1} parent=39 // pred_region
          %s451 = ssub.s32 256, 256
          %452 = vsyncadd %s443, %s451
          %s453 = smul.addr %s22, 2
          %s454 = smul.addr %s453, 128
          %s455 = scalar_lea.hbm %s5, %s454
          %s456 = sshll.u32 %s446, 4
          %s457 = int_to_ptr.vmem [resolvable:$true] %s456
          %462 = dma.vmem_to_hbm [thread:$0]  %s457, 256, %s455, %s443, 128, 128, 8
        $region48: #{tpu_custom_call.1} parent=39 // pred_fallthru
          _
      $region40: #{tpu_custom_call.1} parent=5 // pred_fallthru
        _
      %p463 = scmp.le.s32.totalorder 2, %s17
      // Predicated region
      $region49: #{tpu_custom_call.1} parent=5 // pred_check
        %p464 = pneg %p463
      $region50: #{tpu_custom_call.1} parent=5 // pred_check_branch
        %466 = sbr.rel (%p464) target = $region52
      $region51: #{tpu_custom_call.1} parent=5 // pred_region
        %s467 = ssub.s32 %s17, 2
        // Predicated region
        $region53: #{tpu_custom_call.1} parent=51 // pred_check
          %p468 = pneg %p156
        $region54: #{tpu_custom_call.1} parent=51 // pred_check_branch
          %470 = sbr.rel (%p468) target = $region56
        $region55: #{tpu_custom_call.1} parent=51 // pred_region
          %s471 = sand.u32 %s141, 1
          %s472 = scalar_lea.sflag [#allocation4], %s471
          %s473 = sand.u32 %s141, 1
          %s474 = smul.addr %s473, 16
          %s475 = scalar_lea.vmem [#allocation5], %s474
          %476 = dma.done %s472, 256
        $region56: #{tpu_custom_call.1} parent=51 // pred_fallthru
          _
      $region52: #{tpu_custom_call.1} parent=5 // pred_fallthru
        _
    $region6: #{tpu_custom_call.1} parent=1 // loop_footer
      %s21 = sadd.s32 1, %s17
    $region7: #{tpu_custom_call.1} parent=1 // loop_footer_branch
      %16 = sbr.rel target = $region3
    $region8: #{tpu_custom_call.1} parent=1 // loop_exit
      _
    %477 = vsyncpa [#allocation3], 1
    %s478 = scalar_lea.sflag [#allocation3], 1
    %479 = vsyncpa %s478, 1
    %480 = vsyncpa [#allocation4], 1
    %s481 = scalar_lea.sflag [#allocation4], 1
    %482 = vsyncpa %s481, 1

</llo_original>
